<compile_context>
chip_gen: v7x
topology: tpu7x:2x2x1
jax: 0.10.0
libtpu: 0.0.40
codegen_flags: <defaults>
</compile_context>

<pallas_src>
import jax
import jax.numpy as jnp
from jax.experimental import pallas as pl
from jax.experimental.pallas import tpu as pltpu

# ----------------------------- model hyper-parameters ------------------------------------
N = 2            # batch (clips per call)
T = 8            # frames / tokens per backbone clip (mean-pooled inside the kernel)
C_IN = 256       # backbone feature dim
DIM = 32         # args.hidden_dim
DIM2 = 64        # args.hidden_dim2
DCAT = 3 * DIM   # concatenated fused feature dim (96)
CCAT = 3 * C_IN  # concatenated backbone feature dim (768)
EPS = 1e-5       # nn.LayerNorm default eps


# ---------------------------------- fused kernel ------------------------------------------
def fused_kernel(x_ref, wblk_ref, whead_ref, vecs_ref, out_ref):
    # Frame mean over axis=1; the 1/T scale is folded into W_blk, so only a sublane sum.
    pooled = jnp.sum(x_ref[...], axis=1)                                   # (N, 768)

    # Single block-diagonal projection == cat(ttm@Wt, lam@Wl, asd@Wa) + biases,
    # landing lane-contiguously in registers (no scratch concat).
    feat = (jnp.dot(pooled, wblk_ref[...], preferred_element_type=jnp.float32)
            + vecs_ref[0:1, :])                                            # (N, 96)

    # LayerNorm over the 96 logical lanes.
    g = vecs_ref[1:2, :]
    b = vecs_ref[2:3, :]
    mu = jnp.mean(feat, axis=-1, keepdims=True)
    var = jnp.mean((feat - mu) ** 2, axis=-1, keepdims=True)
    x = (feat - mu) * jax.lax.rsqrt(var + EPS) * g + b

    # fc1 -> ReLU -> fc2 (weights sliced out of the packed head slab).
    w1 = whead_ref[0:DCAT, :]                                              # (96, 64)
    b1 = vecs_ref[3:4, 0:DIM2]                                             # (1, 64)
    h = jnp.maximum(jnp.dot(x, w1, preferred_element_type=jnp.float32) + b1, 0.0)

    w2 = whead_ref[DCAT:DCAT + DIM2, 0:2]                                  # (64, 2)
    b2 = vecs_ref[4:5, 0:2]                                                # (1, 2)
    out_ref[...] = (jnp.dot(h, w2, preferred_element_type=jnp.float32)
                    + b2).astype(out_ref.dtype)


# -------------------------------- pallas_call wrapper --------------------------------------
_VMEM_SPEC = pl.BlockSpec(memory_space=pltpu.MemorySpace.VMEM)


@jax.jit
def forward_pallas(ttm_feat, lam_feat, asd_feat, packed):
    # One lane-contiguous activation operand (ttm | lam | asd), matching W_blk's block order.
    x_cat = jnp.concatenate([ttm_feat, lam_feat, asd_feat], axis=-1)       # (N, T, 768)
    return pl.pallas_call(
        fused_kernel,
        out_shape=jax.ShapeDtypeStruct((N, 2), jnp.float32),
        in_specs=[_VMEM_SPEC, _VMEM_SPEC, _VMEM_SPEC, _VMEM_SPEC],
        out_specs=_VMEM_SPEC,
    )(x_cat, packed["W_blk"], packed["W_head"], packed["vecs"])


# ------------------------------ host-side weight packing -----------------------------------
def pack_params(p):
    """One-time packing of the 12 raw parameters into 3 VMEM-friendly slabs."""
    wblk = jnp.zeros((CCAT, DCAT), jnp.float32)
    wblk = wblk.at[0:C_IN, 0:DIM].set(p["Wt"] / T)               # 1/T mean-scale folded in
    wblk = wblk.at[C_IN:2 * C_IN, DIM:2 * DIM].set(p["Wl"] / T)
    wblk = wblk.at[2 * C_IN:3 * C_IN, 2 * DIM:3 * DIM].set(p["Wa"] / T)

    whead = jnp.zeros((DCAT + DIM2, DIM2), jnp.float32)
    whead = whead.at[0:DCAT, :].set(p["W1"])
    whead = whead.at[DCAT:DCAT + DIM2, 0:2].set(p["W2"])

    vecs = jnp.zeros((5, DCAT), jnp.float32)
    vecs = vecs.at[0, 0:DIM].set(p["bt"][0])
    vecs = vecs.at[0, DIM:2 * DIM].set(p["bl"][0])
    vecs = vecs.at[0, 2 * DIM:3 * DIM].set(p["ba"][0])
    vecs = vecs.at[1, :].set(p["ln_g"][0])
    vecs = vecs.at[2, :].set(p["ln_b"][0])
    vecs = vecs.at[3, 0:DIM2].set(p["b1"][0])
    vecs = vecs.at[4, 0:2].set(p["b2"][0])

    return dict(W_blk=wblk, W_head=whead, vecs=vecs)


# --------------------------------- pure-JAX reference --------------------------------------
def forward_reference(ttm_feat, lam_feat, asd_feat, p):
    m_ttm = ttm_feat.mean(axis=1)
    m_lam = lam_feat.mean(axis=1)
    m_asd = asd_feat.mean(axis=1)
    feat = jnp.concatenate(
        [m_ttm @ p["Wt"] + p["bt"],
         m_lam @ p["Wl"] + p["bl"],
         m_asd @ p["Wa"] + p["ba"]], axis=-1)                              # (N, 96)
    mu = jnp.mean(feat, axis=-1, keepdims=True)
    var = jnp.mean((feat - mu) ** 2, axis=-1, keepdims=True)
    x = (feat - mu) * jax.lax.rsqrt(var + EPS) * p["ln_g"] + p["ln_b"]
    h = jax.nn.relu(x @ p["W1"] + p["b1"])
    return h @ p["W2"] + p["b2"]


# --------------------------------- parameter init ------------------------------------------
def make_params(key):
    ks = jax.random.split(key, 12)

    def nrm(k, shape, s=0.05):
        return (s * jax.random.normal(k, shape)).astype(jnp.float32)

    return dict(
        Wt=nrm(ks[0], (C_IN, DIM)), bt=nrm(ks[1], (1, DIM)),
        Wl=nrm(ks[2], (C_IN, DIM)), bl=nrm(ks[3], (1, DIM)),
        Wa=nrm(ks[4], (C_IN, DIM)), ba=nrm(ks[5], (1, DIM)),
        ln_g=(1.0 + nrm(ks[6], (1, DCAT))).astype(jnp.float32),
        ln_b=nrm(ks[7], (1, DCAT)),
        W1=nrm(ks[8], (DCAT, DIM2)), b1=nrm(ks[9], (1, DIM2)),
        W2=nrm(ks[10], (DIM2, 2)), b2=nrm(ks[11], (1, 2)),
    )


if __name__ == "__main__":
    key = jax.random.PRNGKey(0)
    k_p, k_ttm, k_lam, k_asd = jax.random.split(key, 4)
    params = make_params(k_p)
    packed = jax.tree_util.tree_map(jax.block_until_ready, pack_params(params))

    # Stand-ins for the frozen TTM / LAM / ASD backbone "middle" features.
    ttm_feat = jax.random.normal(k_ttm, (N, T, C_IN), dtype=jnp.float32)
    lam_feat = jax.random.normal(k_lam, (N, T, C_IN), dtype=jnp.float32)
    asd_feat = jax.random.normal(k_asd, (N, T, C_IN), dtype=jnp.float32)

    out = jax.block_until_ready(forward_pallas(ttm_feat, lam_feat, asd_feat, packed))
    assert out.shape == (N, 2), out.shape

    ref = jax.block_until_ready(forward_reference(ttm_feat, lam_feat, asd_feat, params))
    max_diff = float(jnp.max(jnp.abs(out - ref)))
    assert max_diff < 2e-3, f"mismatch vs reference: {max_diff}"

    print("KERNEL_OK")
</pallas_src>

<mosaic_0001>
module attributes {stable_mosaic.version = 11 : i64} {
  func.func @fused_kernel(%arg0: memref<2x8x768xf32, #tpu.memory_space<vmem>>, %arg1: memref<768x96xf32, #tpu.memory_space<vmem>>, %arg2: memref<160x64xf32, #tpu.memory_space<vmem>>, %arg3: memref<5x96xf32, #tpu.memory_space<vmem>>, %arg4: memref<2x2xf32, #tpu.memory_space<vmem>>) attributes {dimension_semantics = [], scalar_prefetch = 0 : i64, scratch_operands = 0 : i64, tpu.core_type = #tpu.core_type<tc>} {
    %c0 = arith.constant 0 : index
    %c0_0 = arith.constant 0 : index
    %c0_1 = arith.constant 0 : index
    %0 = vector.load %arg0[%c0, %c0_0, %c0_1] : memref<2x8x768xf32, #tpu.memory_space<vmem>>, vector<2x8x768xf32>
    %cst = arith.constant dense<0.000000e+00> : vector<2x768xf32>
    %1 = vector.multi_reduction <add>, %0, %cst [1] : vector<2x8x768xf32> to vector<2x768xf32>
    %c0_2 = arith.constant 0 : index
    %c0_3 = arith.constant 0 : index
    %2 = vector.load %arg1[%c0_2, %c0_3] : memref<768x96xf32, #tpu.memory_space<vmem>>, vector<768x96xf32>
    %cst_4 = arith.constant dense<0.000000e+00> : vector<2x96xf32>
    %3 = tpu.matmul %1, %2, %cst_4 {dimension_numbers = #tpu.dot_dimension_numbers<[1], [0], [0], [1], [0, 0, 1, 1], [], []>} : vector<2x768xf32>, vector<768x96xf32>, vector<2x96xf32> -> vector<2x96xf32>
    %c0_5 = arith.constant 0 : index
    %c0_6 = arith.constant 0 : index
    %4 = vector.load %arg3[%c0_5, %c0_6] : memref<5x96xf32, #tpu.memory_space<vmem>>, vector<1x96xf32>
    %5 = vector.broadcast %4 : vector<1x96xf32> to vector<2x96xf32>
    %6 = arith.addf %3, %5 : vector<2x96xf32>
    %c1 = arith.constant 1 : index
    %c0_7 = arith.constant 0 : index
    %7 = vector.load %arg3[%c1, %c0_7] : memref<5x96xf32, #tpu.memory_space<vmem>>, vector<1x96xf32>
    %c2 = arith.constant 2 : index
    %c0_8 = arith.constant 0 : index
    %8 = vector.load %arg3[%c2, %c0_8] : memref<5x96xf32, #tpu.memory_space<vmem>>, vector<1x96xf32>
    %cst_9 = arith.constant dense<0.000000e+00> : vector<2xf32>
    %9 = vector.multi_reduction <add>, %6, %cst_9 [1] : vector<2x96xf32> to vector<2xf32>
    %10 = vector.shape_cast %9 : vector<2xf32> to vector<2x1xf32>
    %cst_10 = arith.constant 9.600000e+01 : f32
    %11 = vector.broadcast %cst_10 : f32 to vector<2x1xf32>
    %12 = arith.divf %10, %11 : vector<2x1xf32>
    %13 = vector.broadcast %12 : vector<2x1xf32> to vector<2x96xf32>
    %14 = arith.subf %6, %13 : vector<2x96xf32>
    %15 = arith.mulf %14, %14 : vector<2x96xf32>
    %cst_11 = arith.constant dense<0.000000e+00> : vector<2xf32>
    %16 = vector.multi_reduction <add>, %15, %cst_11 [1] : vector<2x96xf32> to vector<2xf32>
    %17 = vector.shape_cast %16 : vector<2xf32> to vector<2x1xf32>
    %cst_12 = arith.constant 9.600000e+01 : f32
    %18 = vector.broadcast %cst_12 : f32 to vector<2x1xf32>
    %19 = arith.divf %17, %18 : vector<2x1xf32>
    %20 = vector.broadcast %12 : vector<2x1xf32> to vector<2x96xf32>
    %21 = arith.subf %6, %20 : vector<2x96xf32>
    %cst_13 = arith.constant 9.99999974E-6 : f32
    %22 = vector.broadcast %cst_13 : f32 to vector<2x1xf32>
    %23 = arith.addf %19, %22 : vector<2x1xf32>
    %24 = math.rsqrt %23 : vector<2x1xf32>
    %25 = vector.broadcast %24 : vector<2x1xf32> to vector<2x96xf32>
    %26 = arith.mulf %21, %25 : vector<2x96xf32>
    %27 = vector.broadcast %7 : vector<1x96xf32> to vector<2x96xf32>
    %28 = arith.mulf %26, %27 : vector<2x96xf32>
    %29 = vector.broadcast %8 : vector<1x96xf32> to vector<2x96xf32>
    %30 = arith.addf %28, %29 : vector<2x96xf32>
    %c0_14 = arith.constant 0 : index
    %c0_15 = arith.constant 0 : index
    %31 = vector.load %arg2[%c0_14, %c0_15] : memref<160x64xf32, #tpu.memory_space<vmem>>, vector<96x64xf32>
    %c3 = arith.constant 3 : index
    %c0_16 = arith.constant 0 : index
    %32 = vector.load %arg3[%c3, %c0_16] : memref<5x96xf32, #tpu.memory_space<vmem>>, vector<1x64xf32>
    %cst_17 = arith.constant dense<0.000000e+00> : vector<2x64xf32>
    %33 = tpu.matmul %30, %31, %cst_17 {dimension_numbers = #tpu.dot_dimension_numbers<[1], [0], [0], [1], [0, 0, 1, 1], [], []>} : vector<2x96xf32>, vector<96x64xf32>, vector<2x64xf32> -> vector<2x64xf32>
    %34 = vector.broadcast %32 : vector<1x64xf32> to vector<2x64xf32>
    %35 = arith.addf %33, %34 : vector<2x64xf32>
    %cst_18 = arith.constant 0.000000e+00 : f32
    %36 = vector.broadcast %cst_18 : f32 to vector<2x64xf32>
    %37 = arith.maximumf %35, %36 : vector<2x64xf32>
    %c96 = arith.constant 96 : index
    %c0_19 = arith.constant 0 : index
    %38 = vector.load %arg2[%c96, %c0_19] : memref<160x64xf32, #tpu.memory_space<vmem>>, vector<64x2xf32>
    %c4 = arith.constant 4 : index
    %c0_20 = arith.constant 0 : index
    %39 = vector.load %arg3[%c4, %c0_20] : memref<5x96xf32, #tpu.memory_space<vmem>>, vector<1x2xf32>
    %cst_21 = arith.constant dense<0.000000e+00> : vector<2x2xf32>
    %40 = tpu.matmul %37, %38, %cst_21 {dimension_numbers = #tpu.dot_dimension_numbers<[1], [0], [0], [1], [0, 0, 1, 1], [], []>} : vector<2x64xf32>, vector<64x2xf32>, vector<2x2xf32> -> vector<2x2xf32>
    %41 = vector.broadcast %39 : vector<1x2xf32> to vector<2x2xf32>
    %42 = arith.addf %40, %41 : vector<2x2xf32>
    %c0_22 = arith.constant 0 : index
    %c0_23 = arith.constant 0 : index
    %43 = vector.load %arg4[%c0_22, %c0_23] : memref<2x2xf32, #tpu.memory_space<vmem>>, vector<2x2xf32>
    tpu.vector_store %arg4[%c0_22, %c0_23], %42 {strides = array<i32>} : memref<2x2xf32, #tpu.memory_space<vmem>>, vector<2x2xf32>,
    return
  }
}

</mosaic_0001>

<llo_original>
// kernel: forward_pallas.1
$region0: #{forward_pallas.1}
  #allocation0 [shape = 'u32[]', space=smem, size = 0x4, offset = 0x4, fixed_abs, tag = 'smem constant byte address 0x4 - core index']
  #allocation1 [shape = 'u32[144,128]{1,0:T(1,128)}', space=vmem, size = 0x12000, scoped, tag = 'internal scratch']
  %s0 = inlined_call_operand.vmem [shape: f32[2,8,768], index: 0, kind: input, shape index: {}]
  %s1 = inlined_call_operand.vmem [shape: f32[768,96], index: 1, kind: input, shape index: {}]
  %s2 = inlined_call_operand.vmem [shape: f32[160,64], index: 2, kind: input, shape index: {}]
  %s3 = inlined_call_operand.vmem [shape: f32[5,96], index: 3, kind: input, shape index: {}]
  %s4 = inlined_call_operand.hbm [shape: f32[2,2], index: 4, kind: output, shape index: {}]
  %s5 = sld [smem:[#allocation0]]
  $region26: #{forward_pallas.1} parent=0
    _
  %s7 = ssub.s32 1, %s5
  %s8 = scalar_select 0, %s7, %s5
  $region1: #{forward_pallas.1} parent=0
    #allocation2 [shape = 'u8[1024]{0}', space=vmem, size = 0x400, scoped, tag = 'output window, operand 0, single buffered']
    #allocation3 [shape = 's32[1]{0}', space=sflag, size = 0x4, scoped, tag = 'scoped memory for forward_pallas.1']
    %9 = vsyncpa [#allocation3], 0
    // Predicated region
    $region2: #{forward_pallas.1} parent=1 // pred_check
      _
    $region3: #{forward_pallas.1} parent=1 // pred_check_branch
      %11 = sbr.rel (0) target = $region5
    $region4: #{forward_pallas.1} parent=1 // pred_region
      _
    $region5: #{forward_pallas.1} parent=1 // pred_fallthru
      _
    // Predicated region
    $region6: #{forward_pallas.1} parent=1 // pred_check
      _
    $region7: #{forward_pallas.1} parent=1 // pred_check_branch
      %13 = sbr.rel (0) target = $region9
    $region8: #{forward_pallas.1} parent=1 // pred_region
      _
    $region9: #{forward_pallas.1} parent=1 // pred_fallthru
      _
    // Predicated region
    $region10: #{forward_pallas.1} parent=1 // pred_check
      _
    $region11: #{forward_pallas.1} parent=1 // pred_check_branch
      %15 = sbr.rel (0) target = $region13
    $region12: #{forward_pallas.1} parent=1 // pred_region
      _
    $region13: #{forward_pallas.1} parent=1 // pred_fallthru
      _
    // Predicated region
    $region14: #{forward_pallas.1} parent=1 // pred_check
      _
    $region15: #{forward_pallas.1} parent=1 // pred_check_branch
      %17 = sbr.rel (0) target = $region17
    $region16: #{forward_pallas.1} parent=1 // pred_region
      _
    $region17: #{forward_pallas.1} parent=1 // pred_fallthru
      _
    %v18 = vld [vmem:[%s0] sm:$0xff]
    %v19 = vld [vmem:[%s0 + $0x8] sm:$0xff]
    %v20 = vld [vmem:[%s0 + $0x10] sm:$0xff]
    %v21 = vld [vmem:[%s0 + $0x18] sm:$0xff]
    %v22 = vld [vmem:[%s0 + $0x20] sm:$0xff]
    %v23 = vld [vmem:[%s0 + $0x28] sm:$0xff]
    %v24 = vld [vmem:[%s0 + $0x30] sm:$0xff]
    %v25 = vld [vmem:[%s0 + $0x38] sm:$0xff]
    %v26 = vld [vmem:[%s0 + $0x40] sm:$0xff]
    %v27 = vld [vmem:[%s0 + $0x48] sm:$0xff]
    %v28 = vld [vmem:[%s0 + $0x50] sm:$0xff]
    %v29 = vld [vmem:[%s0 + $0x58] sm:$0xff]
    %v30 = vrot.slane %v18, 4
    %v31 = vadd.f32 %v18, %v30
    %v32 = vrot.slane %v31, 2
    %v33 = vadd.f32 %v31, %v32
    %v34 = vrot.slane %v33, 1
    %v35 = vadd.f32 %v33, %v34
    %v36 = vrot.slane %v19, 4
    %v37 = vadd.f32 %v19, %v36
    %v38 = vrot.slane %v37, 2
    %v39 = vadd.f32 %v37, %v38
    %v40 = vrot.slane %v39, 1
    %v41 = vadd.f32 %v39, %v40
    %v42 = vrot.slane %v20, 4
    %v43 = vadd.f32 %v20, %v42
    %v44 = vrot.slane %v43, 2
    %v45 = vadd.f32 %v43, %v44
    %v46 = vrot.slane %v45, 1
    %v47 = vadd.f32 %v45, %v46
    %v48 = vrot.slane %v21, 4
    %v49 = vadd.f32 %v21, %v48
    %v50 = vrot.slane %v49, 2
    %v51 = vadd.f32 %v49, %v50
    %v52 = vrot.slane %v51, 1
    %v53 = vadd.f32 %v51, %v52
    %v54 = vrot.slane %v22, 4
    %v55 = vadd.f32 %v22, %v54
    %v56 = vrot.slane %v55, 2
    %v57 = vadd.f32 %v55, %v56
    %v58 = vrot.slane %v57, 1
    %v59 = vadd.f32 %v57, %v58
    %v60 = vrot.slane %v23, 4
    %v61 = vadd.f32 %v23, %v60
    %v62 = vrot.slane %v61, 2
    %v63 = vadd.f32 %v61, %v62
    %v64 = vrot.slane %v63, 1
    %v65 = vadd.f32 %v63, %v64
    %v66 = vrot.slane %v24, 4
    %v67 = vadd.f32 %v24, %v66
    %v68 = vrot.slane %v67, 2
    %v69 = vadd.f32 %v67, %v68
    %v70 = vrot.slane %v69, 1
    %v71 = vadd.f32 %v69, %v70
    %v72 = vrot.slane %v25, 4
    %v73 = vadd.f32 %v25, %v72
    %v74 = vrot.slane %v73, 2
    %v75 = vadd.f32 %v73, %v74
    %v76 = vrot.slane %v75, 1
    %v77 = vadd.f32 %v75, %v76
    %v78 = vrot.slane %v26, 4
    %v79 = vadd.f32 %v26, %v78
    %v80 = vrot.slane %v79, 2
    %v81 = vadd.f32 %v79, %v80
    %v82 = vrot.slane %v81, 1
    %v83 = vadd.f32 %v81, %v82
    %v84 = vrot.slane %v27, 4
    %v85 = vadd.f32 %v27, %v84
    %v86 = vrot.slane %v85, 2
    %v87 = vadd.f32 %v85, %v86
    %v88 = vrot.slane %v87, 1
    %v89 = vadd.f32 %v87, %v88
    %v90 = vrot.slane %v28, 4
    %v91 = vadd.f32 %v28, %v90
    %v92 = vrot.slane %v91, 2
    %v93 = vadd.f32 %v91, %v92
    %v94 = vrot.slane %v93, 1
    %v95 = vadd.f32 %v93, %v94
    %v96 = vrot.slane %v29, 4
    %v97 = vadd.f32 %v29, %v96
    %v98 = vrot.slane %v97, 2
    %v99 = vadd.f32 %v97, %v98
    %v100 = vrot.slane %v99, 1
    %v101 = vadd.f32 %v99, %v100
    %v102 = vld [vmem:[%s1] sm:$0xff]
    %v103 = vld [vmem:[%s1 + $0x8] sm:$0xff]
    %v104 = vld [vmem:[%s1 + $0x10] sm:$0xff]
    %v105 = vld [vmem:[%s1 + $0x18] sm:$0xff]
    %v106 = vld [vmem:[%s1 + $0x20] sm:$0xff]
    %v107 = vld [vmem:[%s1 + $0x28] sm:$0xff]
    %v108 = vld [vmem:[%s1 + $0x30] sm:$0xff]
    %v109 = vld [vmem:[%s1 + $0x38] sm:$0xff]
    %v110 = vld [vmem:[%s1 + $0x40] sm:$0xff]
    %v111 = vld [vmem:[%s1 + $0x48] sm:$0xff]
    %v112 = vld [vmem:[%s1 + $0x50] sm:$0xff]
    %v113 = vld [vmem:[%s1 + $0x58] sm:$0xff]
    %v114 = vld [vmem:[%s1 + $0x60] sm:$0xff]
    %v115 = vld [vmem:[%s1 + $0x68] sm:$0xff]
    %v116 = vld [vmem:[%s1 + $0x70] sm:$0xff]
    %v117 = vld [vmem:[%s1 + $0x78] sm:$0xff]
    %v118 = vld [vmem:[%s1 + $0x80] sm:$0xff]
    %v119 = vld [vmem:[%s1 + $0x88] sm:$0xff]
    %v120 = vld [vmem:[%s1 + $0x90] sm:$0xff]
    %v121 = vld [vmem:[%s1 + $0x98] sm:$0xff]
    %v122 = vld [vmem:[%s1 + $0xa0] sm:$0xff]
    %v123 = vld [vmem:[%s1 + $0xa8] sm:$0xff]
    %v124 = vld [vmem:[%s1 + $0xb0] sm:$0xff]
    %v125 = vld [vmem:[%s1 + $0xb8] sm:$0xff]
    %v126 = vld [vmem:[%s1 + $0xc0] sm:$0xff]
    %v127 = vld [vmem:[%s1 + $0xc8] sm:$0xff]
    %v128 = vld [vmem:[%s1 + $0xd0] sm:$0xff]
    %v129 = vld [vmem:[%s1 + $0xd8] sm:$0xff]
    %v130 = vld [vmem:[%s1 + $0xe0] sm:$0xff]
    %v131 = vld [vmem:[%s1 + $0xe8] sm:$0xff]
    %v132 = vld [vmem:[%s1 + $0xf0] sm:$0xff]
    %v133 = vld [vmem:[%s1 + $0xf8] sm:$0xff]
    %v134 = vld [vmem:[%s1 + $0x100] sm:$0xff]
    %v135 = vld [vmem:[%s1 + $0x108] sm:$0xff]
    %v136 = vld [vmem:[%s1 + $0x110] sm:$0xff]
    %v137 = vld [vmem:[%s1 + $0x118] sm:$0xff]
    %v138 = vld [vmem:[%s1 + $0x120] sm:$0xff]
    %v139 = vld [vmem:[%s1 + $0x128] sm:$0xff]
    %v140 = vld [vmem:[%s1 + $0x130] sm:$0xff]
    %v141 = vld [vmem:[%s1 + $0x138] sm:$0xff]
    %v142 = vld [vmem:[%s1 + $0x140] sm:$0xff]
    %v143 = vld [vmem:[%s1 + $0x148] sm:$0xff]
    %v144 = vld [vmem:[%s1 + $0x150] sm:$0xff]
    %v145 = vld [vmem:[%s1 + $0x158] sm:$0xff]
    %v146 = vld [vmem:[%s1 + $0x160] sm:$0xff]
    %v147 = vld [vmem:[%s1 + $0x168] sm:$0xff]
    %v148 = vld [vmem:[%s1 + $0x170] sm:$0xff]
    %v149 = vld [vmem:[%s1 + $0x178] sm:$0xff]
    %v150 = vld [vmem:[%s1 + $0x180] sm:$0xff]
    %v151 = vld [vmem:[%s1 + $0x188] sm:$0xff]
    %v152 = vld [vmem:[%s1 + $0x190] sm:$0xff]
    %v153 = vld [vmem:[%s1 + $0x198] sm:$0xff]
    %v154 = vld [vmem:[%s1 + $0x1a0] sm:$0xff]
    %v155 = vld [vmem:[%s1 + $0x1a8] sm:$0xff]
    %v156 = vld [vmem:[%s1 + $0x1b0] sm:$0xff]
    %v157 = vld [vmem:[%s1 + $0x1b8] sm:$0xff]
    %v158 = vld [vmem:[%s1 + $0x1c0] sm:$0xff]
    %v159 = vld [vmem:[%s1 + $0x1c8] sm:$0xff]
    %v160 = vld [vmem:[%s1 + $0x1d0] sm:$0xff]
    %v161 = vld [vmem:[%s1 + $0x1d8] sm:$0xff]
    %v162 = vld [vmem:[%s1 + $0x1e0] sm:$0xff]
    %v163 = vld [vmem:[%s1 + $0x1e8] sm:$0xff]
    %v164 = vld [vmem:[%s1 + $0x1f0] sm:$0xff]
    %v165 = vld [vmem:[%s1 + $0x1f8] sm:$0xff]
    %v166 = vld [vmem:[%s1 + $0x200] sm:$0xff]
    %v167 = vld [vmem:[%s1 + $0x208] sm:$0xff]
    %v168 = vld [vmem:[%s1 + $0x210] sm:$0xff]
    %v169 = vld [vmem:[%s1 + $0x218] sm:$0xff]
    %v170 = vld [vmem:[%s1 + $0x220] sm:$0xff]
    %v171 = vld [vmem:[%s1 + $0x228] sm:$0xff]
    %v172 = vld [vmem:[%s1 + $0x230] sm:$0xff]
    %v173 = vld [vmem:[%s1 + $0x238] sm:$0xff]
    %v174 = vld [vmem:[%s1 + $0x240] sm:$0xff]
    %v175 = vld [vmem:[%s1 + $0x248] sm:$0xff]
    %v176 = vld [vmem:[%s1 + $0x250] sm:$0xff]
    %v177 = vld [vmem:[%s1 + $0x258] sm:$0xff]
    %v178 = vld [vmem:[%s1 + $0x260] sm:$0xff]
    %v179 = vld [vmem:[%s1 + $0x268] sm:$0xff]
    %v180 = vld [vmem:[%s1 + $0x270] sm:$0xff]
    %v181 = vld [vmem:[%s1 + $0x278] sm:$0xff]
    %v182 = vld [vmem:[%s1 + $0x280] sm:$0xff]
    %v183 = vld [vmem:[%s1 + $0x288] sm:$0xff]
    %v184 = vld [vmem:[%s1 + $0x290] sm:$0xff]
    %v185 = vld [vmem:[%s1 + $0x298] sm:$0xff]
    %v186 = vld [vmem:[%s1 + $0x2a0] sm:$0xff]
    %v187 = vld [vmem:[%s1 + $0x2a8] sm:$0xff]
    %v188 = vld [vmem:[%s1 + $0x2b0] sm:$0xff]
    %v189 = vld [vmem:[%s1 + $0x2b8] sm:$0xff]
    %v190 = vld [vmem:[%s1 + $0x2c0] sm:$0xff]
    %v191 = vld [vmem:[%s1 + $0x2c8] sm:$0xff]
    %v192 = vld [vmem:[%s1 + $0x2d0] sm:$0xff]
    %v193 = vld [vmem:[%s1 + $0x2d8] sm:$0xff]
    %v194 = vld [vmem:[%s1 + $0x2e0] sm:$0xff]
    %v195 = vld [vmem:[%s1 + $0x2e8] sm:$0xff]
    %v196 = vld [vmem:[%s1 + $0x2f0] sm:$0xff]
    %v197 = vld [vmem:[%s1 + $0x2f8] sm:$0xff]
    %v198 = vld [vmem:[%s3] sm:$0x1]
    %v199 = vlaneseq
    %v200 = vshrl.u32 %v199, 7
    %v201 = vsub.s32 0, %v200
    %v202 = vrot.slane %v198, %v201
    %vm215 = vcmask 1041409
    %v216 = vsel %vm215, %v71, %v35
    %v217 = vsel %vm215, %v77, %v41
    %v218 = vsel %vm215, %v83, %v47
    %v219 = vsel %vm215, %v89, %v53
    %v220 = vsel %vm215, %v95, %v59
    %v221 = vsel %vm215, %v101, %v65
    %228 = vmatprep.subr.mxu0 0.0
    %229 = vmatpush1.msra.mxu0 %v102
    %230 = vmatprep.subr.mxu0 0.0
    %231 = vmatpush1.msra.mxu0 %v103
    %232 = vmatprep.subr.mxu0 0.0
    %233 = vmatpush1.msra.mxu0 %v104
    %234 = vmatprep.subr.mxu0 0.0
    %235 = vmatpush1.msra.mxu0 %v105
    %236 = vmatprep.subr.mxu0 0.0
    %237 = vmatpush1.msra.mxu0 %v106
    %238 = vmatprep.subr.mxu0 0.0
    %239 = vmatpush1.msra.mxu0 %v107
    %240 = vmatprep.subr.mxu0 0.0
    %241 = vmatpush1.msra.mxu0 %v108
    %242 = vmatprep.subr.mxu0 0.0
    %243 = vmatpush1.msra.mxu0 %v109
    %244 = vmatprep.subr.mxu0 0.0
    %245 = vmatpush1.msra.mxu0 %v110
    %246 = vmatprep.subr.mxu0 0.0
    %247 = vmatpush1.msra.mxu0 %v111
    %248 = vmatprep.subr.mxu0 0.0
    %249 = vmatpush1.msra.mxu0 %v112
    %250 = vmatprep.subr.mxu0 0.0
    %251 = vmatpush1.msra.mxu0 %v113
    %252 = vmatprep.subr.mxu0 0.0
    %253 = vmatpush1.msra.mxu0 %v114
    %254 = vmatprep.subr.mxu0 0.0
    %255 = vmatpush1.msra.mxu0 %v115
    %256 = vmatprep.subr.mxu0 0.0
    %257 = vmatpush1.msra.mxu0 %v116
    %258 = vmatprep.subr.mxu0 0.0
    %259 = vmatpush1.msra.mxu0 %v117
    %260 = vmatprep.subr.mxu0 0.0
    %261 = vmatpush1.msra.mxu0 %v118
    %262 = vmatprep.subr.mxu0 0.0
    %263 = vmatpush1.msra.mxu0 %v119
    %264 = vmatprep.subr.mxu0 0.0
    %265 = vmatpush1.msra.mxu0 %v120
    %266 = vmatprep.subr.mxu0 0.0
    %267 = vmatpush1.msra.mxu0 %v121
    %268 = vmatprep.subr.mxu0 0.0
    %269 = vmatpush1.msra.mxu0 %v122
    %270 = vmatprep.subr.mxu0 0.0
    %271 = vmatpush1.msra.mxu0 %v123
    %272 = vmatprep.subr.mxu0 0.0
    %273 = vmatpush1.msra.mxu0 %v124
    %274 = vmatprep.subr.mxu0 0.0
    %275 = vmatpush1.msra.mxu0 %v125
    %276 = vmatprep.subr.mxu0 0.0
    %277 = vmatpush1.msra.mxu0 %v126
    %278 = vmatprep.subr.mxu0 0.0
    %279 = vmatpush1.msra.mxu0 %v127
    %280 = vmatprep.subr.mxu0 0.0
    %281 = vmatpush1.msra.mxu0 %v128
    %282 = vmatprep.subr.mxu0 0.0
    %283 = vmatpush1.msra.mxu0 %v129
    %284 = vmatprep.subr.mxu0 0.0
    %285 = vmatpush1.msra.mxu0 %v130
    %286 = vmatprep.subr.mxu0 0.0
    %287 = vmatpush1.msra.mxu0 %v131
    %288 = vmatprep.subr.mxu0 0.0
    %289 = vmatpush1.msra.mxu0 %v132
    %290 = vmatprep.subr.mxu0 0.0
    %291 = vmatpush1.msra.mxu0 %v133
    %292 = vmatprep.mubr.f32.mxu0 %v217
    %293 = vmatmul.mubr.f32.gmra.mrb[0].mxu0 %v216
    %v294 = vpop.f32.mrb[0].mxu0
    %v295 = vadd.f32 %v202, %v294
    %v296 = vpop.f32.mrb[0].mxu0
    %297 = vdwg.mxu0
    %298 = vmatprep.subr.mxu0 0.0
    %299 = vmatpush1.msra.mxu0 %v134
    %300 = vmatprep.subr.mxu0 0.0
    %301 = vmatpush1.msra.mxu0 %v135
    %302 = vmatprep.subr.mxu0 0.0
    %303 = vmatpush1.msra.mxu0 %v136
    %304 = vmatprep.subr.mxu0 0.0
    %305 = vmatpush1.msra.mxu0 %v137
    %306 = vmatprep.subr.mxu0 0.0
    %307 = vmatpush1.msra.mxu0 %v138
    %308 = vmatprep.subr.mxu0 0.0
    %309 = vmatpush1.msra.mxu0 %v139
    %310 = vmatprep.subr.mxu0 0.0
    %311 = vmatpush1.msra.mxu0 %v140
    %312 = vmatprep.subr.mxu0 0.0
    %313 = vmatpush1.msra.mxu0 %v141
    %314 = vmatprep.subr.mxu0 0.0
    %315 = vmatpush1.msra.mxu0 %v142
    %316 = vmatprep.subr.mxu0 0.0
    %317 = vmatpush1.msra.mxu0 %v143
    %318 = vmatprep.subr.mxu0 0.0
    %319 = vmatpush1.msra.mxu0 %v144
    %320 = vmatprep.subr.mxu0 0.0
    %321 = vmatpush1.msra.mxu0 %v145
    %322 = vmatprep.subr.mxu0 0.0
    %323 = vmatpush1.msra.mxu0 %v146
    %324 = vmatprep.subr.mxu0 0.0
    %325 = vmatpush1.msra.mxu0 %v147
    %326 = vmatprep.subr.mxu0 0.0
    %327 = vmatpush1.msra.mxu0 %v148
    %328 = vmatprep.subr.mxu0 0.0
    %329 = vmatpush1.msra.mxu0 %v149
    %330 = vmatprep.subr.mxu0 0.0
    %331 = vmatpush1.msra.mxu0 %v150
    %332 = vmatprep.subr.mxu0 0.0
    %333 = vmatpush1.msra.mxu0 %v151
    %334 = vmatprep.subr.mxu0 0.0
    %335 = vmatpush1.msra.mxu0 %v152
    %336 = vmatprep.subr.mxu0 0.0
    %337 = vmatpush1.msra.mxu0 %v153
    %338 = vmatprep.subr.mxu0 0.0
    %339 = vmatpush1.msra.mxu0 %v154
    %340 = vmatprep.subr.mxu0 0.0
    %341 = vmatpush1.msra.mxu0 %v155
    %342 = vmatprep.subr.mxu0 0.0
    %343 = vmatpush1.msra.mxu0 %v156
    %344 = vmatprep.subr.mxu0 0.0
    %345 = vmatpush1.msra.mxu0 %v157
    %346 = vmatprep.subr.mxu0 0.0
    %347 = vmatpush1.msra.mxu0 %v158
    %348 = vmatprep.subr.mxu0 0.0
    %349 = vmatpush1.msra.mxu0 %v159
    %350 = vmatprep.subr.mxu0 0.0
    %351 = vmatpush1.msra.mxu0 %v160
    %352 = vmatprep.subr.mxu0 0.0
    %353 = vmatpush1.msra.mxu0 %v161
    %354 = vmatprep.subr.mxu0 0.0
    %355 = vmatpush1.msra.mxu0 %v162
    %356 = vmatprep.subr.mxu0 0.0
    %357 = vmatpush1.msra.mxu0 %v163
    %358 = vmatprep.subr.mxu0 0.0
    %359 = vmatpush1.msra.mxu0 %v164
    %360 = vmatprep.subr.mxu0 0.0
    %361 = vmatpush1.msra.mxu0 %v165
    %362 = vmatprep.mubr.f32.mxu0 %v219
    %363 = vmatmul.mubr.f32.gmra.mrb[0].mxu0 %v218
    %v364 = vpop.f32.mrb[0].mxu0
    %v365 = vadd.f32 %v295, %v364
    %v366 = vpop.f32.mrb[0].mxu0
    %367 = vdwg.mxu0
    %368 = vmatprep.subr.mxu0 0.0
    %369 = vmatpush1.msra.mxu0 %v166
    %370 = vmatprep.subr.mxu0 0.0
    %371 = vmatpush1.msra.mxu0 %v167
    %372 = vmatprep.subr.mxu0 0.0
    %373 = vmatpush1.msra.mxu0 %v168
    %374 = vmatprep.subr.mxu0 0.0
    %375 = vmatpush1.msra.mxu0 %v169
    %376 = vmatprep.subr.mxu0 0.0
    %377 = vmatpush1.msra.mxu0 %v170
    %378 = vmatprep.subr.mxu0 0.0
    %379 = vmatpush1.msra.mxu0 %v171
    %380 = vmatprep.subr.mxu0 0.0
    %381 = vmatpush1.msra.mxu0 %v172
    %382 = vmatprep.subr.mxu0 0.0
    %383 = vmatpush1.msra.mxu0 %v173
    %384 = vmatprep.subr.mxu0 0.0
    %385 = vmatpush1.msra.mxu0 %v174
    %386 = vmatprep.subr.mxu0 0.0
    %387 = vmatpush1.msra.mxu0 %v175
    %388 = vmatprep.subr.mxu0 0.0
    %389 = vmatpush1.msra.mxu0 %v176
    %390 = vmatprep.subr.mxu0 0.0
    %391 = vmatpush1.msra.mxu0 %v177
    %392 = vmatprep.subr.mxu0 0.0
    %393 = vmatpush1.msra.mxu0 %v178
    %394 = vmatprep.subr.mxu0 0.0
    %395 = vmatpush1.msra.mxu0 %v179
    %396 = vmatprep.subr.mxu0 0.0
    %397 = vmatpush1.msra.mxu0 %v180
    %398 = vmatprep.subr.mxu0 0.0
    %399 = vmatpush1.msra.mxu0 %v181
    %400 = vmatprep.subr.mxu0 0.0
    %401 = vmatpush1.msra.mxu0 %v182
    %402 = vmatprep.subr.mxu0 0.0
    %403 = vmatpush1.msra.mxu0 %v183
    %404 = vmatprep.subr.mxu0 0.0
    %405 = vmatpush1.msra.mxu0 %v184
    %406 = vmatprep.subr.mxu0 0.0
    %407 = vmatpush1.msra.mxu0 %v185
    %408 = vmatprep.subr.mxu0 0.0
    %409 = vmatpush1.msra.mxu0 %v186
    %410 = vmatprep.subr.mxu0 0.0
    %411 = vmatpush1.msra.mxu0 %v187
    %412 = vmatprep.subr.mxu0 0.0
    %413 = vmatpush1.msra.mxu0 %v188
    %414 = vmatprep.subr.mxu0 0.0
    %415 = vmatpush1.msra.mxu0 %v189
    %416 = vmatprep.subr.mxu0 0.0
    %417 = vmatpush1.msra.mxu0 %v190
    %418 = vmatprep.subr.mxu0 0.0
    %419 = vmatpush1.msra.mxu0 %v191
    %420 = vmatprep.subr.mxu0 0.0
    %421 = vmatpush1.msra.mxu0 %v192
    %422 = vmatprep.subr.mxu0 0.0
    %423 = vmatpush1.msra.mxu0 %v193
    %424 = vmatprep.subr.mxu0 0.0
    %425 = vmatpush1.msra.mxu0 %v194
    %426 = vmatprep.subr.mxu0 0.0
    %427 = vmatpush1.msra.mxu0 %v195
    %428 = vmatprep.subr.mxu0 0.0
    %429 = vmatpush1.msra.mxu0 %v196
    %430 = vmatprep.subr.mxu0 0.0
    %431 = vmatpush1.msra.mxu0 %v197
    %432 = vmatprep.mubr.f32.mxu0 %v221
    %433 = vmatmul.mubr.f32.gmra.mrb[0].mxu0 %v220
    %v434 = vpop.f32.mrb[0].mxu0
    %v435 = vadd.f32 %v365, %v434
    %v436 = vpop.f32.mrb[0].mxu0
    %437 = vdwg.mxu0
    %v438 = vld [vmem:[%s3 + $0x1] sm:$0x1]
    %v439 = vld [vmem:[%s3 + $0x2] sm:$0x1]
    %vm440 = vcmask 779264
    %v441 = vsel %vm440, %v435, 0.0
    %442 = vadd.xlane.f32.xlu0 %v441
    %v443 = vpop.xlane.xlu0 %442
    %v444 = vrcp.pop 96.0
    %v445 = vmul.f32 %v443, %v444
    %v446 = vsub.f32 %v435, %v445
    %v447 = vmul.f32 %v446, %v446
    %v448 = vsel %vm440, %v447, 0.0
    %449 = vadd.xlane.f32.xlu0 %v448
    %v450 = vpop.xlane.xlu0 %449
    %v451 = vmul.f32 %v450, %v444
    %v452 = vadd.f32 %v451, 1e-05
    %v453 = vrsqrt.pop %v452
    %v454 = vmul.f32 %v446, %v453
    %v455 = vlaneseq
    %v456 = vshrl.u32 %v455, 7
    %v457 = vsub.s32 0, %v456
    %v458 = vrot.slane %v438, %v457
    %v459 = vmul.f32 %v454, %v458
    %v460 = vlaneseq
    %v461 = vshrl.u32 %v460, 7
    %v462 = vsub.s32 0, %v461
    %v463 = vrot.slane %v439, %v462
    %v464 = vadd.f32 %v459, %v463
    %v465 = vld [vmem:[%s2] sm:$0xff]
    %v466 = vld [vmem:[%s2 + $0x8] sm:$0xff]
    %v467 = vld [vmem:[%s2 + $0x10] sm:$0xff]
    %v468 = vld [vmem:[%s2 + $0x18] sm:$0xff]
    %v469 = vld [vmem:[%s2 + $0x20] sm:$0xff]
    %v470 = vld [vmem:[%s2 + $0x28] sm:$0xff]
    %v471 = vld [vmem:[%s2 + $0x30] sm:$0xff]
    %v472 = vld [vmem:[%s2 + $0x38] sm:$0xff]
    %v473 = vld [vmem:[%s2 + $0x40] sm:$0xff]
    %v474 = vld [vmem:[%s2 + $0x48] sm:$0xff]
    %v475 = vld [vmem:[%s2 + $0x50] sm:$0xff]
    %v476 = vld [vmem:[%s2 + $0x58] sm:$0xff]
    %v477 = vld [vmem:[%s3 + $0x3] sm:$0x1]
    %v478 = vlaneseq
    %v479 = vshrl.u32 %v478, 7
    %v480 = vsub.s32 0, %v479
    %v481 = vrot.slane %v477, %v480
    %vm482 = vcmask 785408
    %v484 = vsel %vm482, %v464, 0
    %486 = vmatprep.subr.mxu0 0.0
    %487 = vmatpush1.msra.mxu0 %v465
    %488 = vmatprep.subr.mxu0 0.0
    %489 = vmatpush1.msra.mxu0 %v466
    %490 = vmatprep.subr.mxu0 0.0
    %491 = vmatpush1.msra.mxu0 %v467
    %492 = vmatprep.subr.mxu0 0.0
    %493 = vmatpush1.msra.mxu0 %v468
    %494 = vmatprep.subr.mxu0 0.0
    %495 = vmatpush1.msra.mxu0 %v469
    %496 = vmatprep.subr.mxu0 0.0
    %497 = vmatpush1.msra.mxu0 %v470
    %498 = vmatprep.subr.mxu0 0.0
    %499 = vmatpush1.msra.mxu0 %v471
    %500 = vmatprep.subr.mxu0 0.0
    %501 = vmatpush1.msra.mxu0 %v472
    %502 = vmatprep.subr.mxu0 0.0
    %503 = vmatpush1.msra.mxu0 %v473
    %504 = vmatprep.subr.mxu0 0.0
    %505 = vmatpush1.msra.mxu0 %v474
    %506 = vmatprep.subr.mxu0 0.0
    %507 = vmatpush1.msra.mxu0 %v475
    %508 = vmatprep.subr.mxu0 0.0
    %509 = vmatpush1.msra.mxu0 %v476
    %510 = vmatprep.subr.mxu0 0.0
    %511 = vmatpush1.msra.mxu0 0.0
    %512 = vmatprep.subr.mxu0 0.0
    %513 = vmatpush1.msra.mxu0 0.0
    %514 = vmatprep.subr.mxu0 0.0
    %515 = vmatpush1.msra.mxu0 0.0
    %516 = vmatprep.subr.mxu0 0.0
    %517 = vmatpush1.msra.mxu0 0.0
    %518 = vmatprep.subr.mxu0 0.0
    %519 = vmatpush1.msra.mxu0 0.0
    %520 = vmatprep.subr.mxu0 0.0
    %521 = vmatpush1.msra.mxu0 0.0
    %522 = vmatprep.subr.mxu0 0.0
    %523 = vmatpush1.msra.mxu0 0.0
    %524 = vmatprep.subr.mxu0 0.0
    %525 = vmatpush1.msra.mxu0 0.0
    %526 = vmatprep.subr.mxu0 0.0
    %527 = vmatpush1.msra.mxu0 0.0
    %528 = vmatprep.subr.mxu0 0.0
    %529 = vmatpush1.msra.mxu0 0.0
    %530 = vmatprep.subr.mxu0 0.0
    %531 = vmatpush1.msra.mxu0 0.0
    %532 = vmatprep.subr.mxu0 0.0
    %533 = vmatpush1.msra.mxu0 0.0
    %534 = vmatprep.subr.mxu0 0.0
    %535 = vmatpush1.msra.mxu0 0.0
    %536 = vmatprep.subr.mxu0 0.0
    %537 = vmatpush1.msra.mxu0 0.0
    %538 = vmatprep.subr.mxu0 0.0
    %539 = vmatpush1.msra.mxu0 0.0
    %540 = vmatprep.subr.mxu0 0.0
    %541 = vmatpush1.msra.mxu0 0.0
    %542 = vmatprep.subr.mxu0 0.0
    %543 = vmatpush1.msra.mxu0 0.0
    %544 = vmatprep.subr.mxu0 0.0
    %545 = vmatpush1.msra.mxu0 0.0
    %546 = vmatprep.subr.mxu0 0.0
    %547 = vmatpush1.msra.mxu0 0.0
    %548 = vmatprep.subr.mxu0 0.0
    %549 = vmatpush1.msra.mxu0 0.0
    %550 = vmatprep.mubr.f32.mxu0 0.0
    %551 = vmatmul.mubr.f32.gmra.mrb[0].mxu0 %v484
    %v552 = vpop.f32.mrb[0].mxu0
    %v553 = vadd.f32 %v481, %v552
    %v554 = vpop.f32.mrb[0].mxu0
    %555 = vdwg.mxu0
    %v556 = vmax.f32 %v553, 0.0
    %v557 = vld [vmem:[%s2 + $0x60] sm:$0xff]
    %v558 = vld [vmem:[%s2 + $0x68] sm:$0xff]
    %v559 = vld [vmem:[%s2 + $0x70] sm:$0xff]
    %v560 = vld [vmem:[%s2 + $0x78] sm:$0xff]
    %v561 = vld [vmem:[%s2 + $0x80] sm:$0xff]
    %v562 = vld [vmem:[%s2 + $0x88] sm:$0xff]
    %v563 = vld [vmem:[%s2 + $0x90] sm:$0xff]
    %v564 = vld [vmem:[%s2 + $0x98] sm:$0xff]
    %v565 = vld [vmem:[%s3 + $0x4] sm:$0x1]
    %v566 = vlaneseq
    %v567 = vshrl.u32 %v566, 7
    %v568 = vsub.s32 0, %v567
    %v569 = vrot.slane %v565, %v568
    %vm570 = vcmask 523264
    %v572 = vsel %vm570, %v556, 0
    %574 = vmatprep.subr.mxu0 0.0
    %575 = vmatpush1.msra.mxu0 %v557
    %576 = vmatprep.subr.mxu0 0.0
    %577 = vmatpush1.msra.mxu0 %v558
    %578 = vmatprep.subr.mxu0 0.0
    %579 = vmatpush1.msra.mxu0 %v559
    %580 = vmatprep.subr.mxu0 0.0
    %581 = vmatpush1.msra.mxu0 %v560
    %582 = vmatprep.subr.mxu0 0.0
    %583 = vmatpush1.msra.mxu0 %v561
    %584 = vmatprep.subr.mxu0 0.0
    %585 = vmatpush1.msra.mxu0 %v562
    %586 = vmatprep.subr.mxu0 0.0
    %587 = vmatpush1.msra.mxu0 %v563
    %588 = vmatprep.subr.mxu0 0.0
    %589 = vmatpush1.msra.mxu0 %v564
    %590 = vmatprep.subr.mxu0 0.0
    %591 = vmatpush1.msra.mxu0 0.0
    %592 = vmatprep.subr.mxu0 0.0
    %593 = vmatpush1.msra.mxu0 0.0
    %594 = vmatprep.subr.mxu0 0.0
    %595 = vmatpush1.msra.mxu0 0.0
    %596 = vmatprep.subr.mxu0 0.0
    %597 = vmatpush1.msra.mxu0 0.0
    %598 = vmatprep.subr.mxu0 0.0
    %599 = vmatpush1.msra.mxu0 0.0
    %600 = vmatprep.subr.mxu0 0.0
    %601 = vmatpush1.msra.mxu0 0.0
    %602 = vmatprep.subr.mxu0 0.0
    %603 = vmatpush1.msra.mxu0 0.0
    %604 = vmatprep.subr.mxu0 0.0
    %605 = vmatpush1.msra.mxu0 0.0
    %606 = vmatprep.subr.mxu0 0.0
    %607 = vmatpush1.msra.mxu0 0.0
    %608 = vmatprep.subr.mxu0 0.0
    %609 = vmatpush1.msra.mxu0 0.0
    %610 = vmatprep.subr.mxu0 0.0
    %611 = vmatpush1.msra.mxu0 0.0
    %612 = vmatprep.subr.mxu0 0.0
    %613 = vmatpush1.msra.mxu0 0.0
    %614 = vmatprep.subr.mxu0 0.0
    %615 = vmatpush1.msra.mxu0 0.0
    %616 = vmatprep.subr.mxu0 0.0
    %617 = vmatpush1.msra.mxu0 0.0
    %618 = vmatprep.subr.mxu0 0.0
    %619 = vmatpush1.msra.mxu0 0.0
    %620 = vmatprep.subr.mxu0 0.0
    %621 = vmatpush1.msra.mxu0 0.0
    %622 = vmatprep.subr.mxu0 0.0
    %623 = vmatpush1.msra.mxu0 0.0
    %624 = vmatprep.subr.mxu0 0.0
    %625 = vmatpush1.msra.mxu0 0.0
    %626 = vmatprep.subr.mxu0 0.0
    %627 = vmatpush1.msra.mxu0 0.0
    %628 = vmatprep.subr.mxu0 0.0
    %629 = vmatpush1.msra.mxu0 0.0
    %630 = vmatprep.subr.mxu0 0.0
    %631 = vmatpush1.msra.mxu0 0.0
    %632 = vmatprep.subr.mxu0 0.0
    %633 = vmatpush1.msra.mxu0 0.0
    %634 = vmatprep.subr.mxu0 0.0
    %635 = vmatpush1.msra.mxu0 0.0
    %636 = vmatprep.subr.mxu0 0.0
    %637 = vmatpush1.msra.mxu0 0.0
    %638 = vmatprep.mubr.f32.mxu0 0.0
    %639 = vmatmul.mubr.f32.gmra.mrb[0].mxu0 %v572
    %v640 = vpop.f32.mrb[0].mxu0
    %v641 = vadd.f32 %v569, %v640
    %v642 = vpop.f32.mrb[0].mxu0
    %643 = vdwg.mxu0
    %vm644 = vcmask 9216
    %645 = vst.msk [vmem:[#allocation2] sm:$0x3] %vm644, %v641
    // Predicated region
    $region18: #{forward_pallas.1} parent=1 // pred_check
      _
    $region19: #{forward_pallas.1} parent=1 // pred_check_branch
      %647 = sbr.rel (0) target = $region21
    $region20: #{forward_pallas.1} parent=1 // pred_region
      %s649 = ssub.s32 32, 32
      %650 = vsyncadd [#allocation3], %s649
      %s652 = sshll.u32 [#allocation2], 4
      %s653 = int_to_ptr.vmem [resolvable:$true] %s652
      %655 = dma.vmem_to_hbm [thread:$0]  %s653, 32, %s4, [#allocation3]
    $region21: #{forward_pallas.1} parent=1 // pred_fallthru
      _
    // Predicated region
    $region22: #{forward_pallas.1} parent=1 // pred_check
      _
    $region23: #{forward_pallas.1} parent=1 // pred_check_branch
      %657 = sbr.rel (0) target = $region25
    $region24: #{forward_pallas.1} parent=1 // pred_region
      %658 = dma.done [#allocation3], 32
    $region25: #{forward_pallas.1} parent=1 // pred_fallthru
      _
    %659 = vsyncpa [#allocation3], 1

</llo_original>
